<compile_context>
chip_gen: v5e
topology: v5e:2x2
jax: 0.10.0
libtpu: 0.0.40
codegen_flags: <defaults>
</compile_context>

<pallas_src>
import functools

import jax
import jax.numpy as jnp
from jax.experimental import pallas as pl
from jax.experimental.pallas import tpu as pltpu


def _simam_kernel(x_ref, o_ref, *, hw, inv_n, e_lambda):
    # x_ref block: (tile_rows, H*W); each row is one (n, c) plane flattened over H*W.
    x = x_ref[...].astype(jnp.float32)                      # single read of the block
    # Single-pass moments (one reduction sweep over x).
    s1 = jnp.sum(x, axis=1, keepdims=True)                  # (R, 1)
    s2 = jnp.sum(x * x, axis=1, keepdims=True)              # (R, 1)
    mu = s1 * (1.0 / hw)                                    # (R, 1)
    sum_d2 = jnp.maximum(s2 - hw * mu * mu, 0.0)            # clamp: guard cancellation
    inv_denom = 1.0 / (4.0 * (sum_d2 * inv_n + e_lambda))   # per-row scalar, exact
    d = x - mu
    y = d * d * inv_denom + 0.5
    o_ref[...] = (x * jax.nn.sigmoid(y)).astype(o_ref.dtype)


def simam(x, e_lambda=1e-4, *, max_tile_bytes=2 * 1024 * 1024, min_grid_steps=4):
    """x: (N, C, H, W) float -> (N, C, H, W). SimAM forward."""
    N, C, H, W = x.shape
    HW = H * W
    R = N * C
    n_hw = HW - 1

    # Zero-cost layout plumbing: (N, C, H, W) row-major -> (N*C, H*W), lane axis = H*W.
    x_flat = x.reshape(R, HW)

    itemsize = x.dtype.itemsize
    bytes_per_row = HW * itemsize
    # Sublane granule: 8 rows for 32-bit, 16 for 16-bit (packed sublanes).
    row_q = 16 if itemsize == 2 else 8

    # Largest row tile that fits the per-block byte budget.
    max_rows = max(row_q, (max_tile_bytes // bytes_per_row) // row_q * row_q)
    # Aim for >= min_grid_steps grid iterations (software pipelining + v7x dual-TC).
    target = pl.cdiv(R, min_grid_steps)
    target = pl.cdiv(target, row_q) * row_q
    tile_rows = min(max_rows, max(row_q, target))
    if tile_rows >= R:
        tile_rows = R  # full extent is always a legal block shape
    grid_len = pl.cdiv(R, tile_rows)  # ragged last block is fine: rows are independent

    # VMEM budget: 2x in + 2x out buffers + ~6 f32 block temporaries + headroom.
    tile_in_bytes = tile_rows * HW * itemsize
    tile_f32_bytes = tile_rows * HW * 4
    vmem_limit = int(min(48 * 1024 * 1024,
                         max(16 * 1024 * 1024,
                             4 * tile_in_bytes + 6 * tile_f32_bytes + (2 << 20))))

    cost = pl.CostEstimate(
        flops=10 * R * HW,
        transcendentals=R * HW,                 # sigmoid
        bytes_accessed=2 * R * HW * itemsize,   # one read + one write of x
    )

    kernel = functools.partial(
        _simam_kernel, hw=float(HW), inv_n=1.0 / float(n_hw), e_lambda=float(e_lambda))

    out_flat = pl.pallas_call(
        kernel,
        out_shape=jax.ShapeDtypeStruct((R, HW), x.dtype),
        grid_spec=pltpu.PrefetchScalarGridSpec(
            num_scalar_prefetch=0,
            grid=(grid_len,),
            in_specs=[pl.BlockSpec((tile_rows, HW), lambda i: (i, 0))],
            out_specs=pl.BlockSpec((tile_rows, HW), lambda i: (i, 0)),
        ),
        compiler_params=pltpu.CompilerParams(
            dimension_semantics=("parallel",),
            vmem_limit_bytes=vmem_limit,
        ),
        cost_estimate=cost,
    )(x_flat)

    return out_flat.reshape(N, C, H, W)


def _reference(x, e_lambda=1e-4):
    # Pure-JAX reference mirroring the PyTorch SimAM forward.
    N, C, H, W = x.shape
    n_hw = H * W - 1
    mu = jnp.mean(x, axis=(2, 3), keepdims=True)
    d2 = (x - mu) ** 2
    y = d2 / (4.0 * (jnp.sum(d2, axis=(2, 3), keepdims=True) / n_hw + e_lambda)) + 0.5
    return x * jax.nn.sigmoid(y)


if __name__ == "__main__":
    key = jax.random.PRNGKey(0)

    # Canonical small case.
    N, C, H, W = 2, 4, 16, 16
    x = jax.random.normal(key, (N, C, H, W), jnp.float32)
    out = jax.block_until_ready(simam(x, e_lambda=1e-4))
    ref = _reference(x, e_lambda=1e-4)
    assert out.shape == (N, C, H, W)
    assert jnp.allclose(out, ref, atol=1e-5, rtol=1e-5)

    # Larger row count: exercises multi-step grid and the ragged last block
    # (R = 60 rows, tile_rows = 16 -> grid of 4 with a masked final block).
    key2 = jax.random.PRNGKey(1)
    x2 = jax.random.normal(key2, (3, 20, 16, 16), jnp.float32)
    out2 = jax.block_until_ready(simam(x2, e_lambda=1e-4))
    ref2 = _reference(x2, e_lambda=1e-4)
    assert jnp.allclose(out2, ref2, atol=1e-5, rtol=1e-5)

    print("KERNEL_OK")
</pallas_src>

<mosaic_0001>
module attributes {stable_mosaic.version = 11 : i64} {
  func.func @_simam_kernel(%arg0: i32, %arg1: memref<8x256xf32, #tpu.memory_space<vmem>>, %arg2: memref<8x256xf32, #tpu.memory_space<vmem>>) attributes {dimension_semantics = [#tpu.dimension_semantics<parallel>], iteration_bounds = array<i64: 1>, scalar_prefetch = 0 : i64, scratch_operands = 0 : i64, tpu.core_type = #tpu.core_type<tc>, window_params = [{transform_indices = @transform_0, window_bounds = array<i64: 8, 256>}, {transform_indices = @transform_1, window_bounds = array<i64: 8, 256>}]} {
    %c0 = arith.constant 0 : index
    %c0_0 = arith.constant 0 : index
    %0 = vector.load %arg1[%c0, %c0_0] : memref<8x256xf32, #tpu.memory_space<vmem>>, vector<8x256xf32>
    %cst = arith.constant dense<0.000000e+00> : vector<8xf32>
    %1 = vector.multi_reduction <add>, %0, %cst [1] : vector<8x256xf32> to vector<8xf32>
    %2 = vector.shape_cast %1 : vector<8xf32> to vector<8x1xf32>
    %3 = arith.mulf %0, %0 : vector<8x256xf32>
    %cst_1 = arith.constant dense<0.000000e+00> : vector<8xf32>
    %4 = vector.multi_reduction <add>, %3, %cst_1 [1] : vector<8x256xf32> to vector<8xf32>
    %5 = vector.shape_cast %4 : vector<8xf32> to vector<8x1xf32>
    %cst_2 = arith.constant 3.906250e-03 : f32
    %6 = vector.broadcast %cst_2 : f32 to vector<8x1xf32>
    %7 = arith.mulf %2, %6 : vector<8x1xf32>
    %cst_3 = arith.constant 2.560000e+02 : f32
    %8 = vector.broadcast %cst_3 : f32 to vector<8x1xf32>
    %9 = arith.mulf %8, %7 : vector<8x1xf32>
    %10 = arith.mulf %9, %7 : vector<8x1xf32>
    %11 = arith.subf %5, %10 : vector<8x1xf32>
    %cst_4 = arith.constant 0.000000e+00 : f32
    %12 = vector.broadcast %cst_4 : f32 to vector<8x1xf32>
    %13 = arith.maximumf %11, %12 : vector<8x1xf32>
    %cst_5 = arith.constant 0.00392156886 : f32
    %14 = vector.broadcast %cst_5 : f32 to vector<8x1xf32>
    %15 = arith.mulf %13, %14 : vector<8x1xf32>
    %cst_6 = arith.constant 9.99999974E-5 : f32
    %16 = vector.broadcast %cst_6 : f32 to vector<8x1xf32>
    %17 = arith.addf %15, %16 : vector<8x1xf32>
    %cst_7 = arith.constant 4.000000e+00 : f32
    %18 = vector.broadcast %cst_7 : f32 to vector<8x1xf32>
    %19 = arith.mulf %18, %17 : vector<8x1xf32>
    %cst_8 = arith.constant 1.000000e+00 : f32
    %20 = vector.broadcast %cst_8 : f32 to vector<8x1xf32>
    %21 = arith.divf %20, %19 : vector<8x1xf32>
    %22 = vector.broadcast %7 : vector<8x1xf32> to vector<8x256xf32>
    %23 = arith.subf %0, %22 : vector<8x256xf32>
    %24 = arith.mulf %23, %23 : vector<8x256xf32>
    %25 = vector.broadcast %21 : vector<8x1xf32> to vector<8x256xf32>
    %26 = arith.mulf %24, %25 : vector<8x256xf32>
    %cst_9 = arith.constant 5.000000e-01 : f32
    %27 = vector.broadcast %cst_9 : f32 to vector<8x256xf32>
    %28 = arith.addf %26, %27 : vector<8x256xf32>
    %29 = arith.negf %28 : vector<8x256xf32>
    %30 = math.exp %29 : vector<8x256xf32>
    %cst_10 = arith.constant 1.000000e+00 : f32
    %31 = vector.broadcast %cst_10 : f32 to vector<8x256xf32>
    %32 = arith.addf %31, %30 : vector<8x256xf32>
    %33 = arith.divf %31, %32 : vector<8x256xf32>
    %34 = arith.mulf %0, %33 : vector<8x256xf32>
    %c0_11 = arith.constant 0 : index
    %c0_12 = arith.constant 0 : index
    %35 = vector.load %arg2[%c0_11, %c0_12] : memref<8x256xf32, #tpu.memory_space<vmem>>, vector<8x256xf32>
    tpu.vector_store %arg2[%c0_11, %c0_12], %34 {strides = array<i32>} : memref<8x256xf32, #tpu.memory_space<vmem>>, vector<8x256xf32>,
    return
  }
  func.func @transform_0(%arg0: i32) -> (i32, i32) {
    %c0_i32 = arith.constant 0 : i32
    %c0_i32_0 = arith.constant 0 : i32
    return %arg0, %c0_i32 : i32, i32
  }
  func.func @transform_1(%arg0: i32) -> (i32, i32) {
    %c0_i32 = arith.constant 0 : i32
    %c0_i32_0 = arith.constant 0 : i32
    return %arg0, %c0_i32 : i32, i32
  }
}

</mosaic_0001>

<llo_original>
// kernel: tpu_custom_call.1
$region0: #{tpu_custom_call.1}
  #allocation0 [shape = 'u32[]', space=smem, size = 0x4, offset = 0x4, fixed_abs, tag = 'smem constant byte address 0x4 - core index']
  #allocation1 [shape = 'u32[72,128]{1,0:T(1,128)}', space=vmem, size = 0x9000, scoped, tag = 'internal scratch']
  %s0 = inlined_call_operand.hbm [shape: f32[8,256], index: 0, kind: input, shape index: {}]
  %s1 = inlined_call_operand.hbm [shape: f32[8,256], index: 1, kind: output, shape index: {}]
  %s2 = sld [smem:[#allocation0]]
  $region18: #{tpu_custom_call.1} parent=0
    _
  %s4 = ssub.s32 1, %s2
  %s5 = scalar_select 0, %s4, %s2
  $region1: #{tpu_custom_call.1} parent=0
    #allocation2 [shape = 'u8[8192]{0}', space=vmem, size = 0x2000, scoped, tag = 'input window, operand 0, single buffered']
    #allocation3 [shape = 's32[1]{0}', space=sflag, size = 0x4, scoped, tag = 'scoped memory for tpu_custom_call.1']
    #allocation4 [shape = 's32[1]{0}', space=sflag, size = 0x4, scoped, tag = 'scoped memory for tpu_custom_call.1']
    #allocation5 [shape = 'u8[8192]{0}', space=vmem, size = 0x2000, scoped, tag = 'output window, operand 0, single buffered']
    %6 = vsyncpa [#allocation3], 0
    %7 = vsyncpa [#allocation4], 0
    // Predicated region
    $region2: #{tpu_custom_call.1} parent=1 // pred_check
      _
    $region3: #{tpu_custom_call.1} parent=1 // pred_check_branch
      %9 = sbr.rel (0) target = $region5
    $region4: #{tpu_custom_call.1} parent=1 // pred_region
      %11 = vsyncadd [#allocation3], 0
      %s13 = sshll.u32 %s0, 4
      %s14 = int_to_ptr.hbm [resolvable:$true] %s13
      %s15 = sshll.u32 [#allocation2], 4
      %s16 = int_to_ptr.vmem [resolvable:$true] %s15
      %18 = dma.hbm_to_vmem [thread:$0]  %s14, 256, %s16, [#allocation3]
    $region5: #{tpu_custom_call.1} parent=1 // pred_fallthru
      _
    // Predicated region
    $region6: #{tpu_custom_call.1} parent=1 // pred_check
      _
    $region7: #{tpu_custom_call.1} parent=1 // pred_check_branch
      %20 = sbr.rel (0) target = $region9
    $region8: #{tpu_custom_call.1} parent=1 // pred_region
      %22 = dma.done [#allocation3], 256
    $region9: #{tpu_custom_call.1} parent=1 // pred_fallthru
      _
    %v23 = vld [vmem:[#allocation2] sm:$0xff]
    %v24 = vld [vmem:[#allocation2 + $0x8] sm:$0xff]
    %v25 = vadd.f32 %v23, %v24
    %26 = vadd.xlane.f32.xlu0 %v25
    %v27 = vpop.xlane.xlu0 %26
    %v28 = vmul.f32 %v23, %v23
    %v29 = vmul.f32 %v24, %v24
    %v30 = vadd.f32 %v28, %v29
    %31 = vadd.xlane.f32.xlu0 %v30
    %v32 = vpop.xlane.xlu0 %31
    %v33 = vmul.f32 %v27, 0.00390625
    %v34 = vmul.f32 %v33, 256.0
    %v35 = vmul.f32 %v34, %v33
    %v36 = vsub.f32 %v32, %v35
    %v37 = vmax.f32 %v36, 0.0
    %v38 = vmul.f32 %v37, 0.003921569
    %v39 = vadd.f32 %v38, 0.0001
    %v40 = vmul.f32 %v39, 4.0
    %v41 = vrcp.pop %v40
    %v42 = vmul.f32 %v40, %v41
    %v43 = vsub.f32 1.0, %v42
    %v44 = vmul.f32 %v41, %v43
    %v45 = vadd.f32 %v41, %v44
    %vm46 = vweird.f32 %v40
    %vm47 = vweird.f32 %v41
    %vm48 = vmor %vm46, %vm47
    %v49 = vsel %vm48, %v41, %v45
    %v50 = vand.u32 2147483647, %v40
    %vm51 = vcmp.eq.f32.partialorder %v50, 8.507059e+37
    %v52 = vand.u32 %v40, 2147483648
    %v53 = vor.u32 1.1754944e-38, %v52
    %v54 = vsel %vm51, %v53, %v49
    %v55 = vmul.f32 1.0, %v54
    %v56 = vsub.f32 %v23, %v33
    %v57 = vsub.f32 %v24, %v33
    %v58 = vmul.f32 %v56, %v56
    %v59 = vmul.f32 %v57, %v57
    %v60 = vmul.f32 %v58, %v55
    %v61 = vmul.f32 %v59, %v55
    %v62 = vadd.f32 %v60, 0.5
    %v63 = vadd.f32 %v61, 0.5
    %v64 = vxor.u32 %v62, 2147483648
    %v65 = vxor.u32 %v63, 2147483648
    %v66 = vmul.f32 %v64, 1.442695
    %v67 = vpow.pop %v66
    %v68 = vmul.f32 %v65, 1.442695
    %v69 = vpow.pop %v68
    %v70 = vadd.f32 %v67, 1.0
    %v71 = vadd.f32 %v69, 1.0
    %v72 = vrcp.pop %v70
    %v73 = vmul.f32 %v70, %v72
    %v74 = vsub.f32 1.0, %v73
    %v75 = vmul.f32 %v72, %v74
    %v76 = vadd.f32 %v72, %v75
    %vm77 = vweird.f32 %v70
    %vm78 = vweird.f32 %v72
    %vm79 = vmor %vm77, %vm78
    %v80 = vsel %vm79, %v72, %v76
    %v81 = vand.u32 2147483647, %v70
    %vm82 = vcmp.eq.f32.partialorder %v81, 8.507059e+37
    %v83 = vand.u32 %v70, 2147483648
    %v84 = vor.u32 1.1754944e-38, %v83
    %v85 = vsel %vm82, %v84, %v80
    %v86 = vmul.f32 1.0, %v85
    %v87 = vrcp.pop %v71
    %v88 = vmul.f32 %v71, %v87
    %v89 = vsub.f32 1.0, %v88
    %v90 = vmul.f32 %v87, %v89
    %v91 = vadd.f32 %v87, %v90
    %vm92 = vweird.f32 %v71
    %vm93 = vweird.f32 %v87
    %vm94 = vmor %vm92, %vm93
    %v95 = vsel %vm94, %v87, %v91
    %v96 = vand.u32 2147483647, %v71
    %vm97 = vcmp.eq.f32.partialorder %v96, 8.507059e+37
    %v98 = vand.u32 %v71, 2147483648
    %v99 = vor.u32 1.1754944e-38, %v98
    %v100 = vsel %vm97, %v99, %v95
    %v101 = vmul.f32 1.0, %v100
    %v102 = vmul.f32 %v23, %v86
    %v103 = vmul.f32 %v24, %v101
    %104 = vst [vmem:[#allocation5] sm:$0xff] %v102
    %105 = vst [vmem:[#allocation5 + $0x8] sm:$0xff] %v103
    // Predicated region
    $region10: #{tpu_custom_call.1} parent=1 // pred_check
      _
    $region11: #{tpu_custom_call.1} parent=1 // pred_check_branch
      %107 = sbr.rel (0) target = $region13
    $region12: #{tpu_custom_call.1} parent=1 // pred_region
      %109 = vsyncadd [#allocation4], 0
      %s111 = sshll.u32 [#allocation5], 4
      %s112 = int_to_ptr.vmem [resolvable:$true] %s111
      %s113 = sshll.u32 %s1, 4
      %s114 = int_to_ptr.hbm [resolvable:$true] %s113
      %116 = dma.vmem_to_hbm [thread:$0]  %s112, 256, %s114, [#allocation4]
    $region13: #{tpu_custom_call.1} parent=1 // pred_fallthru
      _
    // Predicated region
    $region14: #{tpu_custom_call.1} parent=1 // pred_check
      _
    $region15: #{tpu_custom_call.1} parent=1 // pred_check_branch
      %118 = sbr.rel (0) target = $region17
    $region16: #{tpu_custom_call.1} parent=1 // pred_region
      %120 = dma.done [#allocation4], 256
    $region17: #{tpu_custom_call.1} parent=1 // pred_fallthru
      _
    %121 = vsyncpa [#allocation3], 1
    %122 = vsyncpa [#allocation4], 1

</llo_original>
